<compile_context>
chip_gen: v7x
topology: tpu7x:2x2x1
jax: 0.10.0
libtpu: 0.0.40
codegen_flags: <defaults>
</compile_context>

<pallas_src>
import functools

import jax
import jax.numpy as jnp
from jax.experimental import pallas as pl
from jax.experimental.pallas import tpu as pltpu  # noqa: F401  (kept for scaling knobs)

# ---------------- small synthetic config (BertConfig analogue) ----------------
VOCAB = 100
HIDDEN = 32
MAX_POS = 64
TYPE_VOCAB = 2
LN_EPS = 1e-5
INIT_RANGE = 0.02


# ---------------- fused embeddings kernel (single grid step) ----------------
def _embed_kernel(ids_ref, tbl_ref, ln_ref, out_ref, *, vocab, type_vocab):
    f32 = jnp.float32
    ids = ids_ref[...]                       # [N, 3] int32: (word id, type id, pos id)
    wid = ids[:, 0:1]                        # [N, 1]
    tid = ids[:, 1:2] + vocab                # offset into type rows of the table
    pid = ids[:, 2:3] + (vocab + type_vocab) # offset into position rows of the table
    N = ids.shape[0]
    VT = tbl_ref.shape[0]                    # VOCAB + TYPE_VOCAB + S

    # Combined one-hot for word+type+position: pure VPU broadcast-compares against
    # one 2-D iota; a single MXU matmul then realizes all three gathers + the sum.
    iota = jax.lax.broadcasted_iota(jnp.int32, (N, VT), 1)
    onehot = ((iota == wid) | (iota == tid) | (iota == pid)).astype(f32)   # [N, VT]
    x = jnp.dot(onehot, tbl_ref[...], preferred_element_type=f32)          # [N, H]

    # LayerNorm (eps=1e-5) with single-pass stats: the two cross-lane reductions
    # are independent (no serialization through mu).
    H = x.shape[-1]
    inv_h = 1.0 / H
    s1 = jnp.sum(x, axis=-1, keepdims=True)
    s2 = jnp.sum(x * x, axis=-1, keepdims=True)
    mu = s1 * inv_h
    var = s2 * inv_h - mu * mu
    inv = jax.lax.rsqrt(var + LN_EPS)        # EUP
    gamma = ln_ref[0:1, :]
    beta = ln_ref[1:2, :]
    out_ref[...] = (x - mu) * inv * gamma + beta
    # TODO(synk): dropout omitted (identity in eval mode).


def bert_embeddings_pallas(input_ids, token_type_ids, word_emb, pos_emb, type_emb,
                           ln_gamma, ln_beta):
    B, S = input_ids.shape
    V, H = word_emb.shape
    TV = type_emb.shape[0]
    N = B * S

    if token_type_ids is None:
        token_type_ids = jnp.zeros_like(input_ids)

    # Pack ids: [N, 3] int32 (word id, type id, position id = arange(S) per row).
    pos_ids = jnp.broadcast_to(jnp.arange(S, dtype=jnp.int32)[None, :], (B, S))
    ids = jnp.stack(
        [input_ids.astype(jnp.int32).reshape(N),
         token_type_ids.astype(jnp.int32).reshape(N),
         pos_ids.reshape(N)],
        axis=-1)                                                     # [N, 3]

    # Concatenated lookup table: word rows, then type rows, then position rows 0..S-1.
    table = jnp.concatenate([word_emb, type_emb, pos_emb[:S]], axis=0)   # [V+TV+S, H]
    ln = jnp.stack([ln_gamma.reshape(H), ln_beta.reshape(H)], axis=0)    # [2, H]

    kernel = functools.partial(_embed_kernel, vocab=V, type_vocab=TV)
    full = lambda a: pl.BlockSpec(a.shape, lambda i: (0,) * a.ndim)

    out = pl.pallas_call(
        kernel,
        out_shape=jax.ShapeDtypeStruct((N, H), jnp.float32),
        grid=(1,),                                   # single step: all B*S tokens at once
        in_specs=[full(ids), full(table), full(ln)],
        out_specs=pl.BlockSpec((N, H), lambda i: (0, 0)),
    )(ids, table, ln)
    return out.reshape(B, S, H)


# ---------------- demo / correctness check ----------------
if __name__ == "__main__":
    key = jax.random.PRNGKey(0)
    k_we, k_pe, k_te, k_ids = jax.random.split(key, 4)

    # Parameters mirroring nn.Embedding / nn.LayerNorm defaults.
    word_emb = INIT_RANGE * jax.random.normal(k_we, (VOCAB, HIDDEN), jnp.float32)
    word_emb = word_emb.at[0].set(0.0)     # nn.Embedding(padding_idx=0) zeroes row 0
    pos_emb = INIT_RANGE * jax.random.normal(k_pe, (MAX_POS, HIDDEN), jnp.float32)
    type_emb = INIT_RANGE * jax.random.normal(k_te, (TYPE_VOCAB, HIDDEN), jnp.float32)
    ln_gamma = jnp.ones((HIDDEN,), jnp.float32)    # LayerNorm default: weight = 1
    ln_beta = jnp.zeros((HIDDEN,), jnp.float32)    # LayerNorm default: bias = 0

    B, S = 2, 8
    input_ids = jax.random.randint(k_ids, (B, S), 0, VOCAB, dtype=jnp.int32)
    token_type_ids = jnp.concatenate(
        [jnp.zeros((B, S // 2), jnp.int32), jnp.ones((B, S // 2), jnp.int32)], axis=1)

    out = bert_embeddings_pallas(input_ids, token_type_ids, word_emb, pos_emb,
                                 type_emb, ln_gamma, ln_beta)
    out = jax.block_until_ready(out)

    # Pure-JAX reference (gather + sum + LayerNorm).
    ref = word_emb[input_ids] + pos_emb[:S][None, :, :] + type_emb[token_type_ids]
    mu = ref.mean(-1, keepdims=True)
    var = ((ref - mu) ** 2).mean(-1, keepdims=True)
    ref = (ref - mu) / jnp.sqrt(var + LN_EPS) * ln_gamma + ln_beta

    assert out.shape == (B, S, HIDDEN)
    assert jnp.allclose(out, ref, atol=1e-5, rtol=1e-5), float(jnp.abs(out - ref).max())
    print("KERNEL_OK")
</pallas_src>

<mosaic_0001>
module attributes {stable_mosaic.version = 11 : i64} {
  func.func @_embed_kernel(%arg0: i32, %arg1: memref<16x3xi32, #tpu.memory_space<vmem>>, %arg2: memref<110x32xf32, #tpu.memory_space<vmem>>, %arg3: memref<2x32xf32, #tpu.memory_space<vmem>>, %arg4: memref<16x32xf32, #tpu.memory_space<vmem>>) attributes {dimension_semantics = [#tpu.dimension_semantics<arbitrary>], iteration_bounds = array<i64: 1>, scalar_prefetch = 0 : i64, scratch_operands = 0 : i64, tpu.core_type = #tpu.core_type<tc>, window_params = [{pipeline_mode = #tpu.pipeline_mode<synchronous>, transform_indices = @transform_0, window_bounds = array<i64: 16, 3>}, {pipeline_mode = #tpu.pipeline_mode<synchronous>, transform_indices = @transform_1, window_bounds = array<i64: 110, 32>}, {pipeline_mode = #tpu.pipeline_mode<synchronous>, transform_indices = @transform_2, window_bounds = array<i64: 2, 32>}, {pipeline_mode = #tpu.pipeline_mode<synchronous>, transform_indices = @transform_3, window_bounds = array<i64: 16, 32>}]} {
    %c0 = arith.constant 0 : index
    %c0_0 = arith.constant 0 : index
    %0 = vector.load %arg1[%c0, %c0_0] : memref<16x3xi32, #tpu.memory_space<vmem>>, vector<16x3xi32>
    %1 = vector.extract_strided_slice %0 {offsets = [0, 0], sizes = [16, 1], strides = [1, 1]} : vector<16x3xi32> to vector<16x1xi32>
    %2 = vector.extract_strided_slice %0 {offsets = [0, 1], sizes = [16, 1], strides = [1, 1]} : vector<16x3xi32> to vector<16x1xi32>
    %c100_i32 = arith.constant 100 : i32
    %3 = vector.broadcast %c100_i32 : i32 to vector<16x1xi32>
    %4 = arith.addi %2, %3 : vector<16x1xi32>
    %5 = vector.extract_strided_slice %0 {offsets = [0, 2], sizes = [16, 1], strides = [1, 1]} : vector<16x3xi32> to vector<16x1xi32>
    %c102_i32 = arith.constant 102 : i32
    %6 = vector.broadcast %c102_i32 : i32 to vector<16x1xi32>
    %7 = arith.addi %5, %6 : vector<16x1xi32>
    %8 = tpu.iota {dimensions = array<i32: 1>} : vector<16x110xi32>
    %9 = vector.broadcast %1 : vector<16x1xi32> to vector<16x110xi32>
    %10 = arith.cmpi eq, %8, %9 : vector<16x110xi32>
    %11 = vector.broadcast %4 : vector<16x1xi32> to vector<16x110xi32>
    %12 = arith.cmpi eq, %8, %11 : vector<16x110xi32>
    %13 = arith.ori %10, %12 : vector<16x110xi1>
    %14 = vector.broadcast %7 : vector<16x1xi32> to vector<16x110xi32>
    %15 = arith.cmpi eq, %8, %14 : vector<16x110xi32>
    %16 = arith.ori %13, %15 : vector<16x110xi1>
    %17 = arith.extui %16 : vector<16x110xi1> to vector<16x110xi32>
    %18 = arith.sitofp %17 : vector<16x110xi32> to vector<16x110xf32>
    %c0_1 = arith.constant 0 : index
    %c0_2 = arith.constant 0 : index
    %19 = vector.load %arg2[%c0_1, %c0_2] : memref<110x32xf32, #tpu.memory_space<vmem>>, vector<110x32xf32>
    %cst = arith.constant dense<0.000000e+00> : vector<16x32xf32>
    %20 = tpu.matmul %18, %19, %cst {dimension_numbers = #tpu.dot_dimension_numbers<[1], [0], [0], [1], [0, 0, 1, 1], [], []>} : vector<16x110xf32>, vector<110x32xf32>, vector<16x32xf32> -> vector<16x32xf32>
    %cst_3 = arith.constant dense<0.000000e+00> : vector<16xf32>
    %21 = vector.multi_reduction <add>, %20, %cst_3 [1] : vector<16x32xf32> to vector<16xf32>
    %22 = vector.shape_cast %21 : vector<16xf32> to vector<16x1xf32>
    %23 = arith.mulf %20, %20 : vector<16x32xf32>
    %cst_4 = arith.constant dense<0.000000e+00> : vector<16xf32>
    %24 = vector.multi_reduction <add>, %23, %cst_4 [1] : vector<16x32xf32> to vector<16xf32>
    %25 = vector.shape_cast %24 : vector<16xf32> to vector<16x1xf32>
    %cst_5 = arith.constant 3.125000e-02 : f32
    %26 = vector.broadcast %cst_5 : f32 to vector<16x1xf32>
    %27 = arith.mulf %22, %26 : vector<16x1xf32>
    %cst_6 = arith.constant 3.125000e-02 : f32
    %28 = vector.broadcast %cst_6 : f32 to vector<16x1xf32>
    %29 = arith.mulf %25, %28 : vector<16x1xf32>
    %30 = arith.mulf %27, %27 : vector<16x1xf32>
    %31 = arith.subf %29, %30 : vector<16x1xf32>
    %cst_7 = arith.constant 9.99999974E-6 : f32
    %32 = vector.broadcast %cst_7 : f32 to vector<16x1xf32>
    %33 = arith.addf %31, %32 : vector<16x1xf32>
    %34 = math.rsqrt %33 : vector<16x1xf32>
    %c0_8 = arith.constant 0 : index
    %c0_9 = arith.constant 0 : index
    %35 = vector.load %arg3[%c0_8, %c0_9] : memref<2x32xf32, #tpu.memory_space<vmem>>, vector<1x32xf32>
    %c1 = arith.constant 1 : index
    %c0_10 = arith.constant 0 : index
    %36 = vector.load %arg3[%c1, %c0_10] : memref<2x32xf32, #tpu.memory_space<vmem>>, vector<1x32xf32>
    %37 = vector.broadcast %27 : vector<16x1xf32> to vector<16x32xf32>
    %38 = arith.subf %20, %37 : vector<16x32xf32>
    %39 = vector.broadcast %34 : vector<16x1xf32> to vector<16x32xf32>
    %40 = arith.mulf %38, %39 : vector<16x32xf32>
    %41 = vector.broadcast %35 : vector<1x32xf32> to vector<16x32xf32>
    %42 = arith.mulf %40, %41 : vector<16x32xf32>
    %43 = vector.broadcast %36 : vector<1x32xf32> to vector<16x32xf32>
    %44 = arith.addf %42, %43 : vector<16x32xf32>
    %c0_11 = arith.constant 0 : index
    %c0_12 = arith.constant 0 : index
    %45 = vector.load %arg4[%c0_11, %c0_12] : memref<16x32xf32, #tpu.memory_space<vmem>>, vector<16x32xf32>
    tpu.vector_store %arg4[%c0_11, %c0_12], %44 {strides = array<i32>} : memref<16x32xf32, #tpu.memory_space<vmem>>, vector<16x32xf32>,
    return
  }
  func.func @transform_0(%arg0: i32) -> (i32, i32) {
    %c0_i32 = arith.constant 0 : i32
    %c0_i32_0 = arith.constant 0 : i32
    %c0_i32_1 = arith.constant 0 : i32
    return %c0_i32, %c0_i32_0 : i32, i32
  }
  func.func @transform_1(%arg0: i32) -> (i32, i32) {
    %c0_i32 = arith.constant 0 : i32
    %c0_i32_0 = arith.constant 0 : i32
    %c0_i32_1 = arith.constant 0 : i32
    return %c0_i32, %c0_i32_0 : i32, i32
  }
  func.func @transform_2(%arg0: i32) -> (i32, i32) {
    %c0_i32 = arith.constant 0 : i32
    %c0_i32_0 = arith.constant 0 : i32
    %c0_i32_1 = arith.constant 0 : i32
    return %c0_i32, %c0_i32_0 : i32, i32
  }
  func.func @transform_3(%arg0: i32) -> (i32, i32) {
    %c0_i32 = arith.constant 0 : i32
    %c0_i32_0 = arith.constant 0 : i32
    %c0_i32_1 = arith.constant 0 : i32
    return %c0_i32, %c0_i32_0 : i32, i32
  }
}

</mosaic_0001>

<llo_original>
// kernel: tpu_custom_call.1
$region0: #{tpu_custom_call.1}
  #allocation0 [shape = 'u32[]', space=smem, size = 0x4, offset = 0x4, fixed_abs, tag = 'smem constant byte address 0x4 - core index']
  #allocation1 [shape = 'u32[144,128]{1,0:T(1,128)}', space=vmem, size = 0x12000, scoped, tag = 'internal scratch']
  %s0 = inlined_call_operand.vmem [shape: s32[16,3], index: 0, kind: input, shape index: {}]
  %s1 = inlined_call_operand.vmem [shape: f32[110,32], index: 1, kind: input, shape index: {}]
  %s2 = inlined_call_operand.vmem [shape: f32[2,32], index: 2, kind: input, shape index: {}]
  %s3 = inlined_call_operand.hbm [shape: f32[16,32], index: 3, kind: output, shape index: {}]
  %s4 = sld [smem:[#allocation0]]
  $region22: #{tpu_custom_call.1} parent=0
    _
  %s6 = ssub.s32 1, %s4
  %s7 = scalar_select 0, %s6, %s4
  $region1: #{tpu_custom_call.1} parent=0
    #allocation2 [shape = 'u8[8192]{0}', space=vmem, size = 0x2000, scoped, tag = 'output window, operand 0, single buffered']
    #allocation3 [shape = 's32[1]{0}', space=sflag, size = 0x4, scoped, tag = 'scoped memory for tpu_custom_call.1']
    %8 = vsyncpa [#allocation3], 0
    // Predicated region
    $region2: #{tpu_custom_call.1} parent=1 // pred_check
      _
    $region3: #{tpu_custom_call.1} parent=1 // pred_check_branch
      %10 = sbr.rel (0) target = $region5
    $region4: #{tpu_custom_call.1} parent=1 // pred_region
      _
    $region5: #{tpu_custom_call.1} parent=1 // pred_fallthru
      _
    // Predicated region
    $region6: #{tpu_custom_call.1} parent=1 // pred_check
      _
    $region7: #{tpu_custom_call.1} parent=1 // pred_check_branch
      %12 = sbr.rel (0) target = $region9
    $region8: #{tpu_custom_call.1} parent=1 // pred_region
      _
    $region9: #{tpu_custom_call.1} parent=1 // pred_fallthru
      _
    // Predicated region
    $region10: #{tpu_custom_call.1} parent=1 // pred_check
      _
    $region11: #{tpu_custom_call.1} parent=1 // pred_check_branch
      %14 = sbr.rel (0) target = $region13
    $region12: #{tpu_custom_call.1} parent=1 // pred_region
      _
    $region13: #{tpu_custom_call.1} parent=1 // pred_fallthru
      _
    %v15 = vld [vmem:[%s0] sm:$0xff]
    %v16 = vld [vmem:[%s0 + $0x8] sm:$0xff]
    %v17 = vadd.s32 %v15, 100
    %v18 = vadd.s32 %v16, 100
    %v19 = vadd.s32 %v15, 102
    %v20 = vadd.s32 %v16, 102
    %v21 = vlaneseq
    %v22 = vand.u32 %v21, 127
    %23 = vset.pattern.permute.xlu0 0
    %24 = vperm.xlu0 %23, %v15
    %v25 = vpop.permute.xlu0 %24
    %26 = vset.pattern.permute.xlu0 0
    %27 = vperm.xlu0 %26, %v16
    %v28 = vpop.permute.xlu0 %27
    %vm29 = vcmp.eq.s32.totalorder %v22, %v25
    %vm30 = vcmp.eq.s32.totalorder %v22, %v28
    %31 = vset.pattern.permute.xlu0 1
    %32 = vperm.xlu0 %31, %v17
    %v33 = vpop.permute.xlu0 %32
    %34 = vset.pattern.permute.xlu0 1
    %35 = vperm.xlu0 %34, %v18
    %v36 = vpop.permute.xlu0 %35
    %vm37 = vcmp.eq.s32.totalorder %v22, %v33
    %vm38 = vcmp.eq.s32.totalorder %v22, %v36
    %vm39 = vmor %vm29, %vm37
    %vm40 = vmor %vm30, %vm38
    %41 = vset.pattern.permute.xlu0 2
    %42 = vperm.xlu0 %41, %v19
    %v43 = vpop.permute.xlu0 %42
    %44 = vset.pattern.permute.xlu0 2
    %45 = vperm.xlu0 %44, %v20
    %v46 = vpop.permute.xlu0 %45
    %vm47 = vcmp.eq.s32.totalorder %v22, %v43
    %vm48 = vcmp.eq.s32.totalorder %v22, %v46
    %vm49 = vmor %vm39, %vm47
    %vm50 = vmor %vm40, %vm48
    %v51 = vsel %vm49, 1, 0
    %v52 = vsel %vm50, 1, 0
    %v53 = vcvt.s32.f32 %v51
    %v54 = vcvt.s32.f32 %v52
    %v55 = vld [vmem:[%s1] sm:$0xff]
    %v56 = vld [vmem:[%s1 + $0x8] sm:$0xff]
    %v57 = vld [vmem:[%s1 + $0x10] sm:$0xff]
    %v58 = vld [vmem:[%s1 + $0x18] sm:$0xff]
    %v59 = vld [vmem:[%s1 + $0x20] sm:$0xff]
    %v60 = vld [vmem:[%s1 + $0x28] sm:$0xff]
    %v61 = vld [vmem:[%s1 + $0x30] sm:$0xff]
    %v62 = vld [vmem:[%s1 + $0x38] sm:$0xff]
    %v63 = vld [vmem:[%s1 + $0x40] sm:$0xff]
    %v64 = vld [vmem:[%s1 + $0x48] sm:$0xff]
    %v65 = vld [vmem:[%s1 + $0x50] sm:$0xff]
    %v66 = vld [vmem:[%s1 + $0x58] sm:$0xff]
    %v67 = vld [vmem:[%s1 + $0x60] sm:$0xff]
    %v68 = vld [vmem:[%s1 + $0x68] sm:$0x3f]
    %vm69 = vcmask 900096
    %v71 = vsel %vm69, %v53, 0
    %v74 = vsel %vm69, %v54, 0
    %vm76 = vcmask 1045504
    %v78 = vsel %vm76, %v68, 0
    %80 = vmatprep.subr.mxu0 0.0
    %81 = vmatpush1.msra.mxu0 %v55
    %82 = vmatprep.subr.mxu0 0.0
    %83 = vmatpush1.msra.mxu0 %v56
    %84 = vmatprep.subr.mxu0 0.0
    %85 = vmatpush1.msra.mxu0 %v57
    %86 = vmatprep.subr.mxu0 0.0
    %87 = vmatpush1.msra.mxu0 %v58
    %88 = vmatprep.subr.mxu0 0.0
    %89 = vmatpush1.msra.mxu0 %v59
    %90 = vmatprep.subr.mxu0 0.0
    %91 = vmatpush1.msra.mxu0 %v60
    %92 = vmatprep.subr.mxu0 0.0
    %93 = vmatpush1.msra.mxu0 %v61
    %94 = vmatprep.subr.mxu0 0.0
    %95 = vmatpush1.msra.mxu0 %v62
    %96 = vmatprep.subr.mxu0 0.0
    %97 = vmatpush1.msra.mxu0 %v63
    %98 = vmatprep.subr.mxu0 0.0
    %99 = vmatpush1.msra.mxu0 %v64
    %100 = vmatprep.subr.mxu0 0.0
    %101 = vmatpush1.msra.mxu0 %v65
    %102 = vmatprep.subr.mxu0 0.0
    %103 = vmatpush1.msra.mxu0 %v66
    %104 = vmatprep.subr.mxu0 0.0
    %105 = vmatpush1.msra.mxu0 %v67
    %106 = vmatprep.subr.mxu0 0.0
    %107 = vmatpush1.msra.mxu0 %v78
    %108 = vmatprep.subr.mxu0 0.0
    %109 = vmatpush1.msra.mxu0 0.0
    %110 = vmatprep.subr.mxu0 0.0
    %111 = vmatpush1.msra.mxu0 0.0
    %112 = vmatprep.subr.mxu0 0.0
    %113 = vmatpush1.msra.mxu0 0.0
    %114 = vmatprep.subr.mxu0 0.0
    %115 = vmatpush1.msra.mxu0 0.0
    %116 = vmatprep.subr.mxu0 0.0
    %117 = vmatpush1.msra.mxu0 0.0
    %118 = vmatprep.subr.mxu0 0.0
    %119 = vmatpush1.msra.mxu0 0.0
    %120 = vmatprep.subr.mxu0 0.0
    %121 = vmatpush1.msra.mxu0 0.0
    %122 = vmatprep.subr.mxu0 0.0
    %123 = vmatpush1.msra.mxu0 0.0
    %124 = vmatprep.subr.mxu0 0.0
    %125 = vmatpush1.msra.mxu0 0.0
    %126 = vmatprep.subr.mxu0 0.0
    %127 = vmatpush1.msra.mxu0 0.0
    %128 = vmatprep.subr.mxu0 0.0
    %129 = vmatpush1.msra.mxu0 0.0
    %130 = vmatprep.subr.mxu0 0.0
    %131 = vmatpush1.msra.mxu0 0.0
    %132 = vmatprep.subr.mxu0 0.0
    %133 = vmatpush1.msra.mxu0 0.0
    %134 = vmatprep.subr.mxu0 0.0
    %135 = vmatpush1.msra.mxu0 0.0
    %136 = vmatprep.subr.mxu0 0.0
    %137 = vmatpush1.msra.mxu0 0.0
    %138 = vmatprep.subr.mxu0 0.0
    %139 = vmatpush1.msra.mxu0 0.0
    %140 = vmatprep.subr.mxu0 0.0
    %141 = vmatpush1.msra.mxu0 0.0
    %142 = vmatprep.subr.mxu0 0.0
    %143 = vmatpush1.msra.mxu0 0.0
    %144 = vmatprep.mubr.f32.mxu0 0.0
    %145 = vmatmul.mubr.f32.gmra.mrb[0].mxu0 %v71
    %v146 = vpop.f32.mrb[0].mxu0
    %v147 = vadd.f32 0.0, %v146
    %v148 = vpop.f32.mrb[0].mxu0
    %149 = vmatprep.mubr.f32.mxu0 0.0
    %150 = vmatmul.mubr.f32.gmra.mrb[0].mxu0 %v74
    %v151 = vpop.f32.mrb[0].mxu0
    %v152 = vadd.f32 0.0, %v151
    %v153 = vpop.f32.mrb[0].mxu0
    %154 = vdwg.mxu0
    %vm155 = vcmask 261120
    %v156 = vsel %vm155, %v147, 0.0
    %157 = vadd.xlane.f32.xlu0 %v156
    %v158 = vpop.xlane.xlu0 %157
    %v159 = vsel %vm155, %v152, 0.0
    %160 = vadd.xlane.f32.xlu0 %v159
    %v161 = vpop.xlane.xlu0 %160
    %v162 = vmul.f32 %v147, %v147
    %v163 = vmul.f32 %v152, %v152
    %v164 = vsel %vm155, %v162, 0.0
    %165 = vadd.xlane.f32.xlu0 %v164
    %v166 = vpop.xlane.xlu0 %165
    %v167 = vsel %vm155, %v163, 0.0
    %168 = vadd.xlane.f32.xlu0 %v167
    %v169 = vpop.xlane.xlu0 %168
    %v170 = vmul.f32 %v158, 0.03125
    %v171 = vmul.f32 %v161, 0.03125
    %v172 = vmul.f32 %v166, 0.03125
    %v173 = vmul.f32 %v169, 0.03125
    %v174 = vmul.f32 %v170, %v170
    %v175 = vmul.f32 %v171, %v171
    %v176 = vsub.f32 %v172, %v174
    %v177 = vsub.f32 %v173, %v175
    %v178 = vadd.f32 %v176, 1e-05
    %v179 = vadd.f32 %v177, 1e-05
    %v180 = vrsqrt.pop %v178
    %v181 = vrsqrt.pop %v179
    %v182 = vld [vmem:[%s2] sm:$0x1]
    %v183 = vld [vmem:[%s2 + $0x1] sm:$0x1]
    %v184 = vsub.f32 %v147, %v170
    %v185 = vsub.f32 %v152, %v171
    %v186 = vmul.f32 %v184, %v180
    %v187 = vmul.f32 %v185, %v181
    %v188 = vlaneseq
    %v189 = vshrl.u32 %v188, 7
    %v190 = vsub.s32 0, %v189
    %v191 = vrot.slane %v182, %v190
    %v192 = vmul.f32 %v186, %v191
    %v193 = vmul.f32 %v187, %v191
    %v194 = vlaneseq
    %v195 = vshrl.u32 %v194, 7
    %v196 = vsub.s32 0, %v195
    %v197 = vrot.slane %v183, %v196
    %v198 = vadd.f32 %v192, %v197
    %v199 = vadd.f32 %v193, %v197
    %200 = vst.msk [vmem:[#allocation2] sm:$0xff] %vm155, %v198
    %201 = vst.msk [vmem:[#allocation2 + $0x8] sm:$0xff] %vm155, %v199
    // Predicated region
    $region14: #{tpu_custom_call.1} parent=1 // pred_check
      _
    $region15: #{tpu_custom_call.1} parent=1 // pred_check_branch
      %203 = sbr.rel (0) target = $region17
    $region16: #{tpu_custom_call.1} parent=1 // pred_region
      %s205 = ssub.s32 256, 256
      %206 = vsyncadd [#allocation3], %s205
      %s207 = sshll.u32 [#allocation2], 4
      %s208 = int_to_ptr.vmem [resolvable:$true] %s207
      %213 = dma.vmem_to_hbm [thread:$0]  %s208, 256, %s3, [#allocation3], 128, 128, 8
    $region17: #{tpu_custom_call.1} parent=1 // pred_fallthru
      _
    // Predicated region
    $region18: #{tpu_custom_call.1} parent=1 // pred_check
      _
    $region19: #{tpu_custom_call.1} parent=1 // pred_check_branch
      %215 = sbr.rel (0) target = $region21
    $region20: #{tpu_custom_call.1} parent=1 // pred_region
      %216 = dma.done [#allocation3], 256
    $region21: #{tpu_custom_call.1} parent=1 // pred_fallthru
      _
    %217 = vsyncpa [#allocation3], 1

</llo_original>
